<compile_context>
chip_gen: v5e
topology: v5e:2x2
jax: 0.10.0
libtpu: 0.0.40
codegen_flags: <defaults>
</compile_context>

<pallas_src>
import jax
import jax.numpy as jnp
from jax.experimental import pallas as pl
from jax.experimental.pallas import tpu as pltpu

LANE = 128   # lane tile (last-dim padding target)
F_PAD = 8    # padded input-feature dim (5 -> 8 sublanes)


def _round_up(n, m):
    return (n + m - 1) // m * m


def mlp_kernel(x_ref, w0_ref, b0_ref, w1_ref, b1_ref, w2_ref, b2_ref, o_ref):
    """One batch tile: x_ref [TB, 8] f32 -> o_ref [1, TB] f32."""
    bf16 = jnp.bfloat16
    f32 = jnp.float32

    x = x_ref[...].astype(bf16)                                   # [TB, 8]

    h0 = jnp.dot(x, w0_ref[...], preferred_element_type=f32)      # [TB, Hp]
    h0 = jnp.maximum(h0 + b0_ref[...], 0.0)                       # f32 bias+ReLU

    h1 = jnp.dot(h0.astype(bf16), w1_ref[...],
                 preferred_element_type=f32)                      # [TB, Hp]
    h1 = jnp.maximum(h1 + b1_ref[...], 0.0)

    # Final layer produced directly in lane-dense [1, TB] form:
    #   out[0, b] = sum_h w2[0, h] * h1[b, h]
    out = jax.lax.dot_general(
        w2_ref[...], h1.astype(bf16),
        dimension_numbers=(((1,), (1,)), ((), ())),
        preferred_element_type=f32)                               # [1, TB]
    o_ref[...] = (out + b2_ref[...]).astype(o_ref.dtype)


def net_forward(x, kernel_params, *, tile_b=512):
    """x: [B, 5] float32 -> [B, 1] float32 (kernel_params from prepare_params)."""
    w0, b0, w1, b1, w2, b2 = kernel_params
    B, F = x.shape
    f_pad, hp = w0.shape
    assert F <= f_pad

    tb = int(tile_b)
    b_pad = _round_up(B, tb)
    n_tiles = b_pad // tb

    # Zero-pad batch to a tile multiple and features 5 -> 8.
    xp = jnp.zeros((b_pad, f_pad), x.dtype).at[:B, :F].set(x)

    out = pl.pallas_call(
        mlp_kernel,
        out_shape=jax.ShapeDtypeStruct((1, b_pad), jnp.float32),
        grid=(n_tiles,),
        in_specs=[
            pl.BlockSpec((tb, f_pad), lambda i: (i, 0)),    # x tile (pipelined)
            pl.BlockSpec((f_pad, hp), lambda i: (0, 0)),    # w0 (VMEM-resident)
            pl.BlockSpec((1, hp), lambda i: (0, 0)),        # b0
            pl.BlockSpec((hp, hp), lambda i: (0, 0)),       # w1
            pl.BlockSpec((1, hp), lambda i: (0, 0)),        # b1
            pl.BlockSpec((1, hp), lambda i: (0, 0)),        # w2 row
            pl.BlockSpec((1, 1), lambda i: (0, 0)),         # b2
        ],
        out_specs=pl.BlockSpec((1, tb), lambda i: (0, i)),  # lane-dense output
        compiler_params=pltpu.CompilerParams(
            dimension_semantics=("parallel",)),
    )(xp, w0, b0, w1, b1, w2, b2)

    return out[0, :B].reshape(B, 1)


def init_params(key, n_hidden):
    """torch.nn.Linear-style init, PyTorch layout: W [out, in], b [out]."""
    def linear(k, fan_in, fan_out):
        kw, kb = jax.random.split(k)
        bound = 1.0 / jnp.sqrt(jnp.float32(fan_in))
        W = jax.random.uniform(kw, (fan_out, fan_in), jnp.float32, -bound, bound)
        b = jax.random.uniform(kb, (fan_out,), jnp.float32, -bound, bound)
        return W, b

    k0, k1, k2 = jax.random.split(key, 3)
    W0, b0 = linear(k0, 5, n_hidden)
    W1, b1 = linear(k1, n_hidden, n_hidden)
    W2, b2 = linear(k2, n_hidden, 1)
    return (W0, b0, W1, b1, W2, b2)


def prepare_params(params):
    """Pad to (8, 128) tiles, transpose to [in, out], cast weights to bf16."""
    W0, b0, W1, b1, W2, b2 = params
    H = W0.shape[0]
    hp = _round_up(H, LANE)

    def pad2(a, shape):
        return jnp.zeros(shape, a.dtype).at[:a.shape[0], :a.shape[1]].set(a)

    w0k = pad2(W0.T, (F_PAD, hp)).astype(jnp.bfloat16)    # [8, Hp]
    b0k = pad2(b0.reshape(1, H), (1, hp))                 # [1, Hp] f32
    w1k = pad2(W1.T, (hp, hp)).astype(jnp.bfloat16)       # [Hp, Hp]
    b1k = pad2(b1.reshape(1, H), (1, hp))                 # [1, Hp] f32
    w2k = pad2(W2, (1, hp)).astype(jnp.bfloat16)          # [1, Hp] (row form)
    b2k = b2.reshape(1, 1).astype(jnp.float32)            # [1, 1]
    return (w0k, b0k, w1k, b1k, w2k, b2k)


def net_ref(x, params):
    """Pure-JAX reference mirroring the kernel's bf16-input / f32-accumulate
    numerics (zero padding is exact, so this matches up to summation order)."""
    W0, b0, W1, b1, W2, b2 = params
    bf = lambda a: a.astype(jnp.bfloat16)
    f32 = jnp.float32
    h = jnp.maximum(jnp.dot(bf(x), bf(W0).T, preferred_element_type=f32) + b0, 0.0)
    h = jnp.maximum(jnp.dot(bf(h), bf(W1).T, preferred_element_type=f32) + b1, 0.0)
    return jnp.dot(bf(h), bf(W2).T, preferred_element_type=f32) + b2


if __name__ == "__main__":
    n_hidden = 130      # module default (padded to 256 lanes internally)
    batch = 1000        # not a tile multiple -> exercises batch padding
    tile_b = 256        # small tile for the test; use 512-2048 at scale

    key = jax.random.PRNGKey(0)
    kx, kp = jax.random.split(key)
    x = jax.random.normal(kx, (batch, 5), jnp.float32)

    params = init_params(kp, n_hidden)       # PyTorch-layout f32 params
    kparams = prepare_params(params)         # padded / transposed / bf16

    out = net_forward(x, kparams, tile_b=tile_b)
    out = jax.block_until_ready(out)

    ref = net_ref(x, params)
    assert out.shape == (batch, 1)
    assert jnp.allclose(out, ref, atol=1e-3, rtol=1e-3), \
        float(jnp.max(jnp.abs(out - ref)))

    print("KERNEL_OK")
</pallas_src>

<mosaic_0001>
module attributes {stable_mosaic.version = 11 : i64} {
  func.func @mlp_kernel(%arg0: i32, %arg1: memref<256x8xf32, #tpu.memory_space<vmem>>, %arg2: memref<8x256xbf16, #tpu.memory_space<vmem>>, %arg3: memref<1x256xf32, #tpu.memory_space<vmem>>, %arg4: memref<256x256xbf16, #tpu.memory_space<vmem>>, %arg5: memref<1x256xf32, #tpu.memory_space<vmem>>, %arg6: memref<1x256xbf16, #tpu.memory_space<vmem>>, %arg7: memref<1x1xf32, #tpu.memory_space<vmem>>, %arg8: memref<1x256xf32, #tpu.memory_space<vmem>>) attributes {dimension_semantics = [#tpu.dimension_semantics<parallel>], iteration_bounds = array<i64: 4>, scalar_prefetch = 0 : i64, scratch_operands = 0 : i64, tpu.core_type = #tpu.core_type<tc>, window_params = [{transform_indices = @transform_0, window_bounds = array<i64: 256, 8>}, {pipeline_mode = #tpu.pipeline_mode<synchronous>, transform_indices = @transform_1, window_bounds = array<i64: 8, 256>}, {pipeline_mode = #tpu.pipeline_mode<synchronous>, transform_indices = @transform_2, window_bounds = array<i64: 1, 256>}, {pipeline_mode = #tpu.pipeline_mode<synchronous>, transform_indices = @transform_3, window_bounds = array<i64: 256, 256>}, {pipeline_mode = #tpu.pipeline_mode<synchronous>, transform_indices = @transform_4, window_bounds = array<i64: 1, 256>}, {pipeline_mode = #tpu.pipeline_mode<synchronous>, transform_indices = @transform_5, window_bounds = array<i64: 1, 256>}, {pipeline_mode = #tpu.pipeline_mode<synchronous>, transform_indices = @transform_6, window_bounds = array<i64: 1, 1>}, {transform_indices = @transform_7, window_bounds = array<i64: 1, 256>}]} {
    %c0 = arith.constant 0 : index
    %c0_0 = arith.constant 0 : index
    %0 = vector.load %arg1[%c0, %c0_0] : memref<256x8xf32, #tpu.memory_space<vmem>>, vector<256x8xf32>
    %1 = arith.truncf %0 : vector<256x8xf32> to vector<256x8xbf16>
    %c0_1 = arith.constant 0 : index
    %c0_2 = arith.constant 0 : index
    %2 = vector.load %arg2[%c0_1, %c0_2] : memref<8x256xbf16, #tpu.memory_space<vmem>>, vector<8x256xbf16>
    %cst = arith.constant dense<0.000000e+00> : vector<256x256xf32>
    %3 = tpu.matmul %1, %2, %cst {dimension_numbers = #tpu.dot_dimension_numbers<[1], [0], [0], [1], [0, 0, 1, 1], [], []>} : vector<256x8xbf16>, vector<8x256xbf16>, vector<256x256xf32> -> vector<256x256xf32>
    %c0_3 = arith.constant 0 : index
    %c0_4 = arith.constant 0 : index
    %4 = vector.load %arg3[%c0_3, %c0_4] : memref<1x256xf32, #tpu.memory_space<vmem>>, vector<1x256xf32>
    %5 = vector.broadcast %4 : vector<1x256xf32> to vector<256x256xf32>
    %6 = arith.addf %3, %5 : vector<256x256xf32>
    %cst_5 = arith.constant 0.000000e+00 : f32
    %7 = vector.broadcast %cst_5 : f32 to vector<256x256xf32>
    %8 = arith.maximumf %6, %7 : vector<256x256xf32>
    %9 = arith.truncf %8 : vector<256x256xf32> to vector<256x256xbf16>
    %c0_6 = arith.constant 0 : index
    %c0_7 = arith.constant 0 : index
    %10 = vector.load %arg4[%c0_6, %c0_7] : memref<256x256xbf16, #tpu.memory_space<vmem>>, vector<256x256xbf16>
    %cst_8 = arith.constant dense<0.000000e+00> : vector<256x256xf32>
    %11 = tpu.matmul %9, %10, %cst_8 {dimension_numbers = #tpu.dot_dimension_numbers<[1], [0], [0], [1], [0, 0, 1, 1], [], []>} : vector<256x256xbf16>, vector<256x256xbf16>, vector<256x256xf32> -> vector<256x256xf32>
    %c0_9 = arith.constant 0 : index
    %c0_10 = arith.constant 0 : index
    %12 = vector.load %arg5[%c0_9, %c0_10] : memref<1x256xf32, #tpu.memory_space<vmem>>, vector<1x256xf32>
    %13 = vector.broadcast %12 : vector<1x256xf32> to vector<256x256xf32>
    %14 = arith.addf %11, %13 : vector<256x256xf32>
    %cst_11 = arith.constant 0.000000e+00 : f32
    %15 = vector.broadcast %cst_11 : f32 to vector<256x256xf32>
    %16 = arith.maximumf %14, %15 : vector<256x256xf32>
    %c0_12 = arith.constant 0 : index
    %c0_13 = arith.constant 0 : index
    %17 = vector.load %arg6[%c0_12, %c0_13] : memref<1x256xbf16, #tpu.memory_space<vmem>>, vector<1x256xbf16>
    %18 = arith.truncf %16 : vector<256x256xf32> to vector<256x256xbf16>
    %cst_14 = arith.constant dense<0.000000e+00> : vector<1x256xf32>
    %19 = tpu.matmul %17, %18, %cst_14 {dimension_numbers = #tpu.dot_dimension_numbers<[1], [1], [0], [0], [0, 0, 1, 0], [], []>} : vector<1x256xbf16>, vector<256x256xbf16>, vector<1x256xf32> -> vector<1x256xf32>
    %c0_15 = arith.constant 0 : index
    %c0_16 = arith.constant 0 : index
    %20 = vector.load %arg7[%c0_15, %c0_16] : memref<1x1xf32, #tpu.memory_space<vmem>>, vector<1x1xf32>
    %21 = vector.broadcast %20 : vector<1x1xf32> to vector<1x256xf32>
    %22 = arith.addf %19, %21 : vector<1x256xf32>
    %c0_17 = arith.constant 0 : index
    %c0_18 = arith.constant 0 : index
    %23 = vector.load %arg8[%c0_17, %c0_18] : memref<1x256xf32, #tpu.memory_space<vmem>>, vector<1x256xf32>
    tpu.vector_store %arg8[%c0_17, %c0_18], %22 {strides = array<i32>} : memref<1x256xf32, #tpu.memory_space<vmem>>, vector<1x256xf32>,
    return
  }
  func.func @transform_0(%arg0: i32) -> (i32, i32) {
    %c0_i32 = arith.constant 0 : i32
    %c0_i32_0 = arith.constant 0 : i32
    return %arg0, %c0_i32 : i32, i32
  }
  func.func @transform_1(%arg0: i32) -> (i32, i32) {
    %c0_i32 = arith.constant 0 : i32
    %c0_i32_0 = arith.constant 0 : i32
    %c0_i32_1 = arith.constant 0 : i32
    return %c0_i32, %c0_i32_0 : i32, i32
  }
  func.func @transform_2(%arg0: i32) -> (i32, i32) {
    %c0_i32 = arith.constant 0 : i32
    %c0_i32_0 = arith.constant 0 : i32
    %c0_i32_1 = arith.constant 0 : i32
    return %c0_i32, %c0_i32_0 : i32, i32
  }
  func.func @transform_3(%arg0: i32) -> (i32, i32) {
    %c0_i32 = arith.constant 0 : i32
    %c0_i32_0 = arith.constant 0 : i32
    %c0_i32_1 = arith.constant 0 : i32
    return %c0_i32, %c0_i32_0 : i32, i32
  }
  func.func @transform_4(%arg0: i32) -> (i32, i32) {
    %c0_i32 = arith.constant 0 : i32
    %c0_i32_0 = arith.constant 0 : i32
    %c0_i32_1 = arith.constant 0 : i32
    return %c0_i32, %c0_i32_0 : i32, i32
  }
  func.func @transform_5(%arg0: i32) -> (i32, i32) {
    %c0_i32 = arith.constant 0 : i32
    %c0_i32_0 = arith.constant 0 : i32
    %c0_i32_1 = arith.constant 0 : i32
    return %c0_i32, %c0_i32_0 : i32, i32
  }
  func.func @transform_6(%arg0: i32) -> (i32, i32) {
    %c0_i32 = arith.constant 0 : i32
    %c0_i32_0 = arith.constant 0 : i32
    %c0_i32_1 = arith.constant 0 : i32
    return %c0_i32, %c0_i32_0 : i32, i32
  }
  func.func @transform_7(%arg0: i32) -> (i32, i32) {
    %c0_i32 = arith.constant 0 : i32
    %c0_i32_0 = arith.constant 0 : i32
    return %c0_i32, %arg0 : i32, i32
  }
}

</mosaic_0001>

<llo_original>
// kernel: tpu_custom_call.1
$region0: #{tpu_custom_call.1}
  #allocation0 [shape = 'u32[]', space=smem, size = 0x4, offset = 0x4, fixed_abs, tag = 'smem constant byte address 0x4 - core index']
  #allocation1 [shape = 'u32[72,128]{1,0:T(1,128)}', space=vmem, size = 0x9000, scoped, tag = 'internal scratch']
  #allocation2 [shape = 'f32[1,1]{1,0:T(1,128)S(1)}', space=vmem, size = 0x200, scoped, tag = 'scoped memory for tpu_custom_call.1']
  %s0 = inlined_call_operand.vmem [shape: f32[1024,8], index: 0, kind: input, shape index: {}]
  %s1 = inlined_call_operand.vmem [shape: bf16[8,256], index: 1, kind: input, shape index: {}]
  %s2 = inlined_call_operand.vmem [shape: f32[1,256], index: 2, kind: input, shape index: {}]
  %s3 = inlined_call_operand.vmem [shape: bf16[256,256], index: 3, kind: input, shape index: {}]
  %s4 = inlined_call_operand.vmem [shape: f32[1,256], index: 4, kind: input, shape index: {}]
  %s5 = inlined_call_operand.vmem [shape: bf16[1,256], index: 5, kind: input, shape index: {}]
  %s6 = inlined_call_operand.<no memory space> [shape: f32[1,1], index: 6, kind: input, shape index: {}]
  %s7 = inlined_call_operand.hbm [shape: f32[1,1024], index: 7, kind: output, shape index: {}]
  %s8 = sld [smem:[#allocation0]]
  $region61: #{tpu_custom_call.1} parent=0
    _
  %s10 = ssub.s32 1, %s8
  %s11 = scalar_select 0, %s10, %s8
  %v12 = vstv %s6
  %13 = vst [vmem:[#allocation2] sm:$0x1] %v12
  $region1: #{tpu_custom_call.1} parent=0
    #allocation3 [shape = 'u8[2048]{0}', space=vmem, size = 0x800, scoped, tag = 'output window, operand 0']
    #allocation4 [shape = 's32[2]{0}', space=sflag, size = 0x8, scoped, tag = 'scoped memory for tpu_custom_call.1']
    %14 = vsyncpa [#allocation4], 0
    %s15 = scalar_lea.sflag [#allocation4], 1
    %16 = vsyncpa %s15, 0
    loop: start=0, step=1, limit=6
    $region2: #{tpu_custom_call.1} parent=1 // loop_pre_header
      _
    $region3: #{tpu_custom_call.1} parent=1 // loop_header
      %s18 = sphi 0, %s22
      %p19 = scmp.ge.s32.totalorder %s18, 6
      %s28 = sphi 0, %s30
      %s31 = sphi 0, %s28
      %s32 = sphi 0, %s31
      %s48 = sphi 0, %s32
      %s52 = sphi 0, %s52
      %s54 = sphi 0, %s52
      %s55 = sphi 0, %s54
      %s69 = sphi 0, %s55
      %s73 = sphi 0, %s73
      %s75 = sphi 0, %s73
      %s76 = sphi 0, %s75
      %s90 = sphi 0, %s76
      %s94 = sphi 0, %s94
      %s96 = sphi 0, %s94
      %s97 = sphi 0, %s96
      %s111 = sphi 0, %s97
      %s115 = sphi 0, %s115
      %s117 = sphi 0, %s115
      %s118 = sphi 0, %s117
      %s132 = sphi 0, %s118
      %s136 = sphi 0, %s136
      %s138 = sphi 0, %s136
      %s139 = sphi 0, %s138
      %s153 = sphi 0, %s139
      %s157 = sphi 0, %s157
      %s159 = sphi 0, %s157
      %s160 = sphi 0, %s159
      %s174 = sphi 0, %s160
      %s180 = sphi 0, %s182
      %s183 = sphi 0, %s180
      %s184 = sphi 0, %s183
      %s200 = sphi 0, %s184
    $region4: #{tpu_custom_call.1} parent=1 // loop_header_branch
      %21 = sbr.rel (%p19) target = $region8
    $region5: #{tpu_custom_call.1} parent=1 // loop_body
      %s23 = ssub.s32 %s18, 1
      %s24 = ssub.s32 %s18, 2
      %s25 = sadd.s32 %s18, 1
      %s26 = ssub.s32 %s18, %s25
      %p27 = scmp.eq.s32.totalorder %s26, 0
      %s29 = sadd.s32 %s28, 1
      %s30 = scalar_select %p27, %s28, %s29
      %p33 = pneg %p27
      %p34 = scmp.eq.s32.totalorder %s18, 3
      %p35 = por %p33, %p34
      %p36 = scmp.ne.s32.totalorder %s28, %s31
      %p37 = scmp.eq.s32.totalorder %s18, 0
      %p38 = por %p36, %p37
      %p39 = scmp.ne.s32.totalorder %s28, %s31
      %p40 = scmp.eq.s32.totalorder %s23, 3
      %p41 = por %p39, %p40
      %p42 = scmp.ne.s32.totalorder %s31, %s32
      %p43 = scmp.eq.s32.totalorder %s23, 0
      %p44 = por %p42, %p43
      %p45 = scmp.ne.s32.totalorder %s31, %s32
      %p46 = scmp.eq.s32.totalorder %s24, 3
      %p47 = por %p45, %p46
      %p49 = scmp.ne.s32.totalorder %s32, %s48
      %p50 = scmp.eq.s32.totalorder %s24, 0
      %p51 = por %p49, %p50
      %s53 = sadd.s32 %s52, 1
      %p56 = scmp.eq.s32.totalorder %s18, 3
      %p57 = scmp.ne.s32.totalorder %s52, %s54
      %p58 = scmp.eq.s32.totalorder %s18, 0
      %p59 = por %p57, %p58
      %p60 = scmp.ne.s32.totalorder %s52, %s54
      %p61 = scmp.eq.s32.totalorder %s23, 3
      %p62 = por %p60, %p61
      %p63 = scmp.ne.s32.totalorder %s54, %s55
      %p64 = scmp.eq.s32.totalorder %s23, 0
      %p65 = por %p63, %p64
      %p66 = scmp.ne.s32.totalorder %s54, %s55
      %p67 = scmp.eq.s32.totalorder %s24, 3
      %p68 = por %p66, %p67
      %p70 = scmp.ne.s32.totalorder %s55, %s69
      %p71 = scmp.eq.s32.totalorder %s24, 0
      %p72 = por %p70, %p71
      %s74 = sadd.s32 %s73, 1
      %p77 = scmp.eq.s32.totalorder %s18, 3
      %p78 = scmp.ne.s32.totalorder %s73, %s75
      %p79 = scmp.eq.s32.totalorder %s18, 0
      %p80 = por %p78, %p79
      %p81 = scmp.ne.s32.totalorder %s73, %s75
      %p82 = scmp.eq.s32.totalorder %s23, 3
      %p83 = por %p81, %p82
      %p84 = scmp.ne.s32.totalorder %s75, %s76
      %p85 = scmp.eq.s32.totalorder %s23, 0
      %p86 = por %p84, %p85
      %p87 = scmp.ne.s32.totalorder %s75, %s76
      %p88 = scmp.eq.s32.totalorder %s24, 3
      %p89 = por %p87, %p88
      %p91 = scmp.ne.s32.totalorder %s76, %s90
      %p92 = scmp.eq.s32.totalorder %s24, 0
      %p93 = por %p91, %p92
      %s95 = sadd.s32 %s94, 1
      %p98 = scmp.eq.s32.totalorder %s18, 3
      %p99 = scmp.ne.s32.totalorder %s94, %s96
      %p100 = scmp.eq.s32.totalorder %s18, 0
      %p101 = por %p99, %p100
      %p102 = scmp.ne.s32.totalorder %s94, %s96
      %p103 = scmp.eq.s32.totalorder %s23, 3
      %p104 = por %p102, %p103
      %p105 = scmp.ne.s32.totalorder %s96, %s97
      %p106 = scmp.eq.s32.totalorder %s23, 0
      %p107 = por %p105, %p106
      %p108 = scmp.ne.s32.totalorder %s96, %s97
      %p109 = scmp.eq.s32.totalorder %s24, 3
      %p110 = por %p108, %p109
      %p112 = scmp.ne.s32.totalorder %s97, %s111
      %p113 = scmp.eq.s32.totalorder %s24, 0
      %p114 = por %p112, %p113
      %s116 = sadd.s32 %s115, 1
      %p119 = scmp.eq.s32.totalorder %s18, 3
      %p120 = scmp.ne.s32.totalorder %s115, %s117
      %p121 = scmp.eq.s32.totalorder %s18, 0
      %p122 = por %p120, %p121
      %p123 = scmp.ne.s32.totalorder %s115, %s117
      %p124 = scmp.eq.s32.totalorder %s23, 3
      %p125 = por %p123, %p124
      %p126 = scmp.ne.s32.totalorder %s117, %s118
      %p127 = scmp.eq.s32.totalorder %s23, 0
      %p128 = por %p126, %p127
      %p129 = scmp.ne.s32.totalorder %s117, %s118
      %p130 = scmp.eq.s32.totalorder %s24, 3
      %p131 = por %p129, %p130
      %p133 = scmp.ne.s32.totalorder %s118, %s132
      %p134 = scmp.eq.s32.totalorder %s24, 0
      %p135 = por %p133, %p134
      %s137 = sadd.s32 %s136, 1
      %p140 = scmp.eq.s32.totalorder %s18, 3
      %p141 = scmp.ne.s32.totalorder %s136, %s138
      %p142 = scmp.eq.s32.totalorder %s18, 0
      %p143 = por %p141, %p142
      %p144 = scmp.ne.s32.totalorder %s136, %s138
      %p145 = scmp.eq.s32.totalorder %s23, 3
      %p146 = por %p144, %p145
      %p147 = scmp.ne.s32.totalorder %s138, %s139
      %p148 = scmp.eq.s32.totalorder %s23, 0
      %p149 = por %p147, %p148
      %p150 = scmp.ne.s32.totalorder %s138, %s139
      %p151 = scmp.eq.s32.totalorder %s24, 3
      %p152 = por %p150, %p151
      %p154 = scmp.ne.s32.totalorder %s139, %s153
      %p155 = scmp.eq.s32.totalorder %s24, 0
      %p156 = por %p154, %p155
      %s158 = sadd.s32 %s157, 1
      %p161 = scmp.eq.s32.totalorder %s18, 3
      %p162 = scmp.ne.s32.totalorder %s157, %s159
      %p163 = scmp.eq.s32.totalorder %s18, 0
      %p164 = por %p162, %p163
      %p165 = scmp.ne.s32.totalorder %s157, %s159
      %p166 = scmp.eq.s32.totalorder %s23, 3
      %p167 = por %p165, %p166
      %p168 = scmp.ne.s32.totalorder %s159, %s160
      %p169 = scmp.eq.s32.totalorder %s23, 0
      %p170 = por %p168, %p169
      %p171 = scmp.ne.s32.totalorder %s159, %s160
      %p172 = scmp.eq.s32.totalorder %s24, 3
      %p173 = por %p171, %p172
      %p175 = scmp.ne.s32.totalorder %s160, %s174
      %p176 = scmp.eq.s32.totalorder %s24, 0
      %p177 = por %p175, %p176
      %s178 = ssub.s32 %s18, %s25
      %p179 = scmp.eq.s32.totalorder %s178, 0
      %s181 = sadd.s32 %s180, 1
      %s182 = scalar_select %p179, %s180, %s181
      %p185 = pneg %p179
      %p186 = scmp.eq.s32.totalorder %s18, 3
      %p187 = por %p185, %p186
      %p188 = scmp.ne.s32.totalorder %s180, %s183
      %p189 = scmp.eq.s32.totalorder %s18, 0
      %p190 = por %p188, %p189
      %p191 = scmp.ne.s32.totalorder %s180, %s183
      %p192 = scmp.eq.s32.totalorder %s23, 3
      %p193 = por %p191, %p192
      %p194 = scmp.ne.s32.totalorder %s183, %s184
      %p195 = scmp.eq.s32.totalorder %s23, 0
      %p196 = por %p194, %p195
      %p197 = scmp.ne.s32.totalorder %s183, %s184
      %p198 = scmp.eq.s32.totalorder %s24, 3
      %p199 = por %p197, %p198
      %p201 = scmp.ne.s32.totalorder %s184, %s200
      %p202 = scmp.eq.s32.totalorder %s24, 0
      %p203 = por %p201, %p202
      %p204 = scmp.le.s32.totalorder 1, %s18
      %p205 = scmp.lt.s32.totalorder %s18, 5
      %p206 = pnand %p204, %p205
      %p207 = pneg %p206
      // Predicated region
      $region9: #{tpu_custom_call.1} parent=5 // pred_check
        _
      $region10: #{tpu_custom_call.1} parent=5 // pred_check_branch
        %209 = sbr.rel (%p206) target = $region12
      $region11: #{tpu_custom_call.1} parent=5 // pred_region
        %s210 = ssub.s32 %s18, 1
        // Predicated region
        $region13: #{tpu_custom_call.1} parent=11 // pred_check
          %p211 = pneg %p65
        $region14: #{tpu_custom_call.1} parent=11 // pred_check_branch
          %213 = sbr.rel (%p211) target = $region16
        $region15: #{tpu_custom_call.1} parent=11 // pred_region
          _
        $region16: #{tpu_custom_call.1} parent=11 // pred_fallthru
          _
        // Predicated region
        $region17: #{tpu_custom_call.1} parent=11 // pred_check
          %p214 = pneg %p86
        $region18: #{tpu_custom_call.1} parent=11 // pred_check_branch
          %216 = sbr.rel (%p214) target = $region20
        $region19: #{tpu_custom_call.1} parent=11 // pred_region
          _
        $region20: #{tpu_custom_call.1} parent=11 // pred_fallthru
          _
        // Predicated region
        $region21: #{tpu_custom_call.1} parent=11 // pred_check
          %p217 = pneg %p107
        $region22: #{tpu_custom_call.1} parent=11 // pred_check_branch
          %219 = sbr.rel (%p217) target = $region24
        $region23: #{tpu_custom_call.1} parent=11 // pred_region
          _
        $region24: #{tpu_custom_call.1} parent=11 // pred_fallthru
          _
        // Predicated region
        $region25: #{tpu_custom_call.1} parent=11 // pred_check
          %p220 = pneg %p128
        $region26: #{tpu_custom_call.1} parent=11 // pred_check_branch
          %222 = sbr.rel (%p220) target = $region28
        $region27: #{tpu_custom_call.1} parent=11 // pred_region
          _
        $region28: #{tpu_custom_call.1} parent=11 // pred_fallthru
          _
        // Predicated region
        $region29: #{tpu_custom_call.1} parent=11 // pred_check
          %p223 = pneg %p149
        $region30: #{tpu_custom_call.1} parent=11 // pred_check_branch
          %225 = sbr.rel (%p223) target = $region32
        $region31: #{tpu_custom_call.1} parent=11 // pred_region
          _
        $region32: #{tpu_custom_call.1} parent=11 // pred_fallthru
          _
        // Predicated region
        $region33: #{tpu_custom_call.1} parent=11 // pred_check
          %p226 = pneg %p170
        $region34: #{tpu_custom_call.1} parent=11 // pred_check_branch
          %228 = sbr.rel (%p226) target = $region36
        $region35: #{tpu_custom_call.1} parent=11 // pred_region
          _
        $region36: #{tpu_custom_call.1} parent=11 // pred_fallthru
          _
      $region12: #{tpu_custom_call.1} parent=5 // pred_fallthru
        _
      %p229 = scmp.lt.s32.totalorder %s18, 4
      // Predicated region
      $region37: #{tpu_custom_call.1} parent=5 // pred_check
        %p230 = pneg %p229
      $region38: #{tpu_custom_call.1} parent=5 // pred_check_branch
        %232 = sbr.rel (%p230) target = $region40
      $region39: #{tpu_custom_call.1} parent=5 // pred_region
        // Predicated region
        $region41: #{tpu_custom_call.1} parent=39 // pred_check
          %p233 = pneg %p38
        $region42: #{tpu_custom_call.1} parent=39 // pred_check_branch
          %235 = sbr.rel (%p233) target = $region44
        $region43: #{tpu_custom_call.1} parent=39 // pred_region
          %s236 = smul.u32 32, %s18
          %p237 = scmp.lt.s32.totalorder %s236, 127
          %s238 = scalar_select %p237, %s236, 127
          %s239 = smul.addr %s238, 8
          %s240 = scalar_lea.vmem %s0, %s239
          %s241 = smul.u32 32, %s18
        $region44: #{tpu_custom_call.1} parent=39 // pred_fallthru
          _
      $region40: #{tpu_custom_call.1} parent=5 // pred_fallthru
        _
      %p242 = scmp.le.s32.totalorder 1, %s18
      %p243 = scmp.lt.s32.totalorder %s18, 5
      %p244 = pnand %p242, %p243
      %p245 = pneg %p244
      // Predicated region
      $region45: #{tpu_custom_call.1} parent=5 // pred_check
        _
      $region46: #{tpu_custom_call.1} parent=5 // pred_check_branch
        %247 = sbr.rel (%p244) target = $region48
      $region47: #{tpu_custom_call.1} parent=5 // pred_region
        %s248 = ssub.s32 %s18, 1
        %s249 = smul.u32 32, %s23
        %p250 = scmp.lt.s32.totalorder %s249, 127
        %s251 = scalar_select %p250, %s249, 127
        %s252 = smul.addr %s251, 8
        %s253 = scalar_lea.vmem %s0, %s252
        %p254 = pneg %p44
        %p255 = pneg %p41
        %p256 = pneg %p65
        %p257 = pneg %p62
        %p258 = pneg %p86
        %p259 = pneg %p83
        %p260 = pneg %p107
        %p261 = pneg %p104
        %p262 = pneg %p128
        %p263 = pneg %p125
        %p264 = pneg %p149
        %p265 = pneg %p146
        %p266 = pneg %p170
        %p267 = pneg %p167
        %p268 = pneg %p196
        %p269 = pneg %p193
        %s270 = sand.u32 %s183, 1
        %s271 = scalar_lea.sflag [#allocation4], %s270
        %s272 = sand.u32 %s183, 1
        %s273 = smul.addr %s272, 2
        %s274 = scalar_lea.vmem [#allocation3], %s273
        %s275 = smul.u32 32, %s23
        %p276 = scmp.lt.s32.totalorder %s275, 127
        %s277 = scalar_select %p276, %s275, 127
        %s278 = smul.addr %s277, 8
        %s279 = scalar_lea.vmem %s0, %s278
        %s280 = smul.u32 32, %s23
        %s281 = smul.u32 2, %s23
        %v283 = vld [vmem:[%s279] sm:$0xff]
        %v284 = vld [vmem:[%s279 + $0x8] sm:$0xff]
        %v285 = vld [vmem:[%s279 + $0x10] sm:$0xff]
        %v286 = vld [vmem:[%s279 + $0x18] sm:$0xff]
        %v287 = vld [vmem:[%s279 + $0x20] sm:$0xff]
        %v288 = vld [vmem:[%s279 + $0x28] sm:$0xff]
        %v289 = vld [vmem:[%s279 + $0x30] sm:$0xff]
        %v290 = vld [vmem:[%s279 + $0x38] sm:$0xff]
        %v291 = vld [vmem:[%s279 + $0x40] sm:$0xff]
        %v292 = vld [vmem:[%s279 + $0x48] sm:$0xff]
        %v293 = vld [vmem:[%s279 + $0x50] sm:$0xff]
        %v294 = vld [vmem:[%s279 + $0x58] sm:$0xff]
        %v295 = vld [vmem:[%s279 + $0x60] sm:$0xff]
        %v296 = vld [vmem:[%s279 + $0x68] sm:$0xff]
        %v297 = vld [vmem:[%s279 + $0x70] sm:$0xff]
        %v298 = vld [vmem:[%s279 + $0x78] sm:$0xff]
        %v299 = vld [vmem:[%s279 + $0x80] sm:$0xff]
        %v300 = vld [vmem:[%s279 + $0x88] sm:$0xff]
        %v301 = vld [vmem:[%s279 + $0x90] sm:$0xff]
        %v302 = vld [vmem:[%s279 + $0x98] sm:$0xff]
        %v303 = vld [vmem:[%s279 + $0xa0] sm:$0xff]
        %v304 = vld [vmem:[%s279 + $0xa8] sm:$0xff]
        %v305 = vld [vmem:[%s279 + $0xb0] sm:$0xff]
        %v306 = vld [vmem:[%s279 + $0xb8] sm:$0xff]
        %v307 = vld [vmem:[%s279 + $0xc0] sm:$0xff]
        %v308 = vld [vmem:[%s279 + $0xc8] sm:$0xff]
        %v309 = vld [vmem:[%s279 + $0xd0] sm:$0xff]
        %v310 = vld [vmem:[%s279 + $0xd8] sm:$0xff]
        %v311 = vld [vmem:[%s279 + $0xe0] sm:$0xff]
        %v312 = vld [vmem:[%s279 + $0xe8] sm:$0xff]
        %v313 = vld [vmem:[%s279 + $0xf0] sm:$0xff]
        %v314 = vld [vmem:[%s279 + $0xf8] sm:$0xff]
        %v315 = vpack.c.bf16 %v284, %v283
        %v316 = vpack.c.bf16 %v286, %v285
        %v317 = vpack.c.bf16 %v288, %v287
        %v318 = vpack.c.bf16 %v290, %v289
        %v319 = vpack.c.bf16 %v292, %v291
        %v320 = vpack.c.bf16 %v294, %v293
        %v321 = vpack.c.bf16 %v296, %v295
        %v322 = vpack.c.bf16 %v298, %v297
        %v323 = vpack.c.bf16 %v300, %v299
        %v324 = vpack.c.bf16 %v302, %v301
        %v325 = vpack.c.bf16 %v304, %v303
        %v326 = vpack.c.bf16 %v306, %v305
        %v327 = vpack.c.bf16 %v308, %v307
        %v328 = vpack.c.bf16 %v310, %v309
        %v329 = vpack.c.bf16 %v312, %v311
        %v330 = vpack.c.bf16 %v314, %v313
        %v331 = vld [vmem:[%s1] sm:$0xff]
        %v332 = vld [vmem:[%s2] sm:$0x3]
        %v334 = vperm.slane %v332, 0
        %v335 = vperm.slane %v332, 1
        %v339 = vunpack.c.l.b16 %v331
        %v340 = vunpack.c.h.b16 %v331
        %v341 = vpack.c.b16 %v339, %v339
        %v342 = vpack.c.b16 %v340, %v340
        %vm343 = vcmask 64512
        %v345 = vsel %vm343, %v315, 0
        %v348 = vsel %vm343, %v316, 0
        %v351 = vsel %vm343, %v317, 0
        %v354 = vsel %vm343, %v318, 0
        %v357 = vsel %vm343, %v319, 0
        %v360 = vsel %vm343, %v320, 0
        %v363 = vsel %vm343, %v321, 0
        %v366 = vsel %vm343, %v322, 0
        %v369 = vsel %vm343, %v323, 0
        %v372 = vsel %vm343, %v324, 0
        %v375 = vsel %vm343, %v325, 0
        %v378 = vsel %vm343, %v326, 0
        %v381 = vsel %vm343, %v327, 0
        %v384 = vsel %vm343, %v328, 0
        %v387 = vsel %vm343, %v329, 0
        %v390 = vsel %vm343, %v330, 0
        %vm392 = vcmask 1043456
        %v394 = vsel %vm392, %v341, 0
        %v397 = vsel %vm392, %v342, 0
        %399 = vmatpush.bf16.msra.mxu0 0
        %400 = vmatpush.bf16.msra.mxu0 0
        %401 = vmatpush.bf16.msra.mxu0 0
        %402 = vmatpush.bf16.msra.mxu0 0
        %403 = vmatpush.bf16.msra.mxu0 0
        %404 = vmatpush.bf16.msra.mxu0 0
        %405 = vmatpush.bf16.msra.mxu0 0
        %406 = vmatpush.bf16.msra.mxu0 %v394
        %407 = vmatmul.bf16.gmra.mxu0 %v345
        %v408 = vpop.f32.mrf.mxu0
        %v409 = vadd.f32 %v334, %v408
        %v410 = vpop.f32.mrf.mxu0
        %v411 = vadd.f32 %v334, %v410
        %412 = vmatmul.bf16.gmra.mxu0 %v348
        %v413 = vpop.f32.mrf.mxu0
        %v414 = vadd.f32 %v334, %v413
        %v415 = vpop.f32.mrf.mxu0
        %v416 = vadd.f32 %v334, %v415
        %417 = vmatmul.bf16.gmra.mxu0 %v351
        %v418 = vpop.f32.mrf.mxu0
        %v419 = vadd.f32 %v334, %v418
        %v420 = vpop.f32.mrf.mxu0
        %v421 = vadd.f32 %v334, %v420
        %422 = vmatmul.bf16.gmra.mxu0 %v354
        %v423 = vpop.f32.mrf.mxu0
        %v424 = vadd.f32 %v334, %v423
        %v425 = vpop.f32.mrf.mxu0
        %v426 = vadd.f32 %v334, %v425
        %427 = vmatmul.bf16.gmra.mxu0 %v357
        %v428 = vpop.f32.mrf.mxu0
        %v429 = vadd.f32 %v334, %v428
        %v430 = vpop.f32.mrf.mxu0
        %v431 = vadd.f32 %v334, %v430
        %432 = vmatmul.bf16.gmra.mxu0 %v360
        %v433 = vpop.f32.mrf.mxu0
        %v434 = vadd.f32 %v334, %v433
        %v435 = vpop.f32.mrf.mxu0
        %v436 = vadd.f32 %v334, %v435
        %437 = vmatmul.bf16.gmra.mxu0 %v363
        %v438 = vpop.f32.mrf.mxu0
        %v439 = vadd.f32 %v334, %v438
        %v440 = vpop.f32.mrf.mxu0
        %v441 = vadd.f32 %v334, %v440
        %442 = vmatmul.bf16.gmra.mxu0 %v366
        %v443 = vpop.f32.mrf.mxu0
        %v444 = vadd.f32 %v334, %v443
        %v445 = vpop.f32.mrf.mxu0
        %v446 = vadd.f32 %v334, %v445
        %447 = vmatmul.bf16.gmra.mxu0 %v369
        %v448 = vpop.f32.mrf.mxu0
        %v449 = vadd.f32 %v334, %v448
        %v450 = vpop.f32.mrf.mxu0
        %v451 = vadd.f32 %v334, %v450
        %452 = vmatmul.bf16.gmra.mxu0 %v372
        %v453 = vpop.f32.mrf.mxu0
        %v454 = vadd.f32 %v334, %v453
        %v455 = vpop.f32.mrf.mxu0
        %v456 = vadd.f32 %v334, %v455
        %457 = vmatmul.bf16.gmra.mxu0 %v375
        %v458 = vpop.f32.mrf.mxu0
        %v459 = vadd.f32 %v334, %v458
        %v460 = vpop.f32.mrf.mxu0
        %v461 = vadd.f32 %v334, %v460
        %462 = vmatmul.bf16.gmra.mxu0 %v378
        %v463 = vpop.f32.mrf.mxu0
        %v464 = vadd.f32 %v334, %v463
        %v465 = vpop.f32.mrf.mxu0
        %v466 = vadd.f32 %v334, %v465
        %467 = vmatmul.bf16.gmra.mxu0 %v381
        %v468 = vpop.f32.mrf.mxu0
        %v469 = vadd.f32 %v334, %v468
        %v470 = vpop.f32.mrf.mxu0
        %v471 = vadd.f32 %v334, %v470
        %472 = vmatmul.bf16.gmra.mxu0 %v384
        %v473 = vpop.f32.mrf.mxu0
        %v474 = vadd.f32 %v334, %v473
        %v475 = vpop.f32.mrf.mxu0
        %v476 = vadd.f32 %v334, %v475
        %477 = vmatmul.bf16.gmra.mxu0 %v387
        %v478 = vpop.f32.mrf.mxu0
        %v479 = vadd.f32 %v334, %v478
        %v480 = vpop.f32.mrf.mxu0
        %v481 = vadd.f32 %v334, %v480
        %482 = vmatmul.bf16.gmra.mxu0 %v390
        %v483 = vpop.f32.mrf.mxu0
        %v484 = vadd.f32 %v334, %v483
        %v485 = vpop.f32.mrf.mxu0
        %v486 = vadd.f32 %v334, %v485
        %487 = vdwg.mxu0
        %488 = vmatpush.bf16.msra.mxu0 0
        %489 = vmatpush.bf16.msra.mxu0 0
        %490 = vmatpush.bf16.msra.mxu0 0
        %491 = vmatpush.bf16.msra.mxu0 0
        %492 = vmatpush.bf16.msra.mxu0 0
        %493 = vmatpush.bf16.msra.mxu0 0
        %494 = vmatpush.bf16.msra.mxu0 0
        %495 = vmatpush.bf16.msra.mxu0 %v397
        %496 = vmatmul.bf16.gmra.mxu0 %v345
        %v497 = vpop.f32.mrf.mxu0
        %v498 = vadd.f32 %v335, %v497
        %v499 = vpop.f32.mrf.mxu0
        %v500 = vadd.f32 %v335, %v499
        %501 = vmatmul.bf16.gmra.mxu0 %v348
        %v502 = vpop.f32.mrf.mxu0
        %v503 = vadd.f32 %v335, %v502
        %v504 = vpop.f32.mrf.mxu0
        %v505 = vadd.f32 %v335, %v504
        %506 = vmatmul.bf16.gmra.mxu0 %v351
        %v507 = vpop.f32.mrf.mxu0
        %v508 = vadd.f32 %v335, %v507
        %v509 = vpop.f32.mrf.mxu0
        %v510 = vadd.f32 %v335, %v509
        %511 = vmatmul.bf16.gmra.mxu0 %v354
        %v512 = vpop.f32.mrf.mxu0
        %v513 = vadd.f32 %v335, %v512
        %v514 = vpop.f32.mrf.mxu0
        %v515 = vadd.f32 %v335, %v514
        %516 = vmatmul.bf16.gmra.mxu0 %v357
        %v517 = vpop.f32.mrf.mxu0
        %v518 = vadd.f32 %v335, %v517
        %v519 = vpop.f32.mrf.mxu0
        %v520 = vadd.f32 %v335, %v519
        %521 = vmatmul.bf16.gmra.mxu0 %v360
        %v522 = vpop.f32.mrf.mxu0
        %v523 = vadd.f32 %v335, %v522
        %v524 = vpop.f32.mrf.mxu0
        %v525 = vadd.f32 %v335, %v524
        %526 = vmatmul.bf16.gmra.mxu0 %v363
        %v527 = vpop.f32.mrf.mxu0
        %v528 = vadd.f32 %v335, %v527
        %v529 = vpop.f32.mrf.mxu0
        %v530 = vadd.f32 %v335, %v529
        %531 = vmatmul.bf16.gmra.mxu0 %v366
        %v532 = vpop.f32.mrf.mxu0
        %v533 = vadd.f32 %v335, %v532
        %v534 = vpop.f32.mrf.mxu0
        %v535 = vadd.f32 %v335, %v534
        %536 = vmatmul.bf16.gmra.mxu0 %v369
        %v537 = vpop.f32.mrf.mxu0
        %v538 = vadd.f32 %v335, %v537
        %v539 = vpop.f32.mrf.mxu0
        %v540 = vadd.f32 %v335, %v539
        %541 = vmatmul.bf16.gmra.mxu0 %v372
        %v542 = vpop.f32.mrf.mxu0
        %v543 = vadd.f32 %v335, %v542
        %v544 = vpop.f32.mrf.mxu0
        %v545 = vadd.f32 %v335, %v544
        %546 = vmatmul.bf16.gmra.mxu0 %v375
        %v547 = vpop.f32.mrf.mxu0
        %v548 = vadd.f32 %v335, %v547
        %v549 = vpop.f32.mrf.mxu0
        %v550 = vadd.f32 %v335, %v549
        %551 = vmatmul.bf16.gmra.mxu0 %v378
        %v552 = vpop.f32.mrf.mxu0
        %v553 = vadd.f32 %v335, %v552
        %v554 = vpop.f32.mrf.mxu0
        %v555 = vadd.f32 %v335, %v554
        %556 = vmatmul.bf16.gmra.mxu0 %v381
        %v557 = vpop.f32.mrf.mxu0
        %v558 = vadd.f32 %v335, %v557
        %v559 = vpop.f32.mrf.mxu0
        %v560 = vadd.f32 %v335, %v559
        %561 = vmatmul.bf16.gmra.mxu0 %v384
        %v562 = vpop.f32.mrf.mxu0
        %v563 = vadd.f32 %v335, %v562
        %v564 = vpop.f32.mrf.mxu0
        %v565 = vadd.f32 %v335, %v564
        %566 = vmatmul.bf16.gmra.mxu0 %v387
        %v567 = vpop.f32.mrf.mxu0
        %v568 = vadd.f32 %v335, %v567
        %v569 = vpop.f32.mrf.mxu0
        %v570 = vadd.f32 %v335, %v569
        %571 = vmatmul.bf16.gmra.mxu0 %v390
        %v572 = vpop.f32.mrf.mxu0
        %v573 = vadd.f32 %v335, %v572
        %v574 = vpop.f32.mrf.mxu0
        %v575 = vadd.f32 %v335, %v574
        %576 = vdwg.mxu0
        %v577 = vmax.f32 %v409, 0.0
        %v578 = vmax.f32 %v498, 0.0
        %v579 = vmax.f32 %v411, 0.0
        %v580 = vmax.f32 %v500, 0.0
        %v581 = vmax.f32 %v414, 0.0
        %v582 = vmax.f32 %v503, 0.0
        %v583 = vmax.f32 %v416, 0.0
        %v584 = vmax.f32 %v505, 0.0
        %v585 = vmax.f32 %v419, 0.0
        %v586 = vmax.f32 %v508, 0.0
        %v587 = vmax.f32 %v421, 0.0
        %v588 = vmax.f32 %v510, 0.0
        %v589 = vmax.f32 %v424, 0.0
        %v590 = vmax.f32 %v513, 0.0
        %v591 = vmax.f32 %v426, 0.0
        %v592 = vmax.f32 %v515, 0.0
        %v593 = vmax.f32 %v429, 0.0
        %v594 = vmax.f32 %v518, 0.0
        %v595 = vmax.f32 %v431, 0.0
        %v596 = vmax.f32 %v520, 0.0
        %v597 = vmax.f32 %v434, 0.0
        %v598 = vmax.f32 %v523, 0.0
        %v599 = vmax.f32 %v436, 0.0
        %v600 = vmax.f32 %v525, 0.0
        %v601 = vmax.f32 %v439, 0.0
        %v602 = vmax.f32 %v528, 0.0
        %v603 = vmax.f32 %v441, 0.0
        %v604 = vmax.f32 %v530, 0.0
        %v605 = vmax.f32 %v444, 0.0
        %v606 = vmax.f32 %v533, 0.0
        %v607 = vmax.f32 %v446, 0.0
        %v608 = vmax.f32 %v535, 0.0
        %v609 = vmax.f32 %v449, 0.0
        %v610 = vmax.f32 %v538, 0.0
        %v611 = vmax.f32 %v451, 0.0
        %v612 = vmax.f32 %v540, 0.0
        %v613 = vmax.f32 %v454, 0.0
        %v614 = vmax.f32 %v543, 0.0
        %v615 = vmax.f32 %v456, 0.0
        %v616 = vmax.f32 %v545, 0.0
        %v617 = vmax.f32 %v459, 0.0
        %v618 = vmax.f32 %v548, 0.0
        %v619 = vmax.f32 %v461, 0.0
        %v620 = vmax.f32 %v550, 0.0
        %v621 = vmax.f32 %v464, 0.0
        %v622 = vmax.f32 %v553, 0.0
        %v623 = vmax.f32 %v466, 0.0
        %v624 = vmax.f32 %v555, 0.0
        %v625 = vmax.f32 %v469, 0.0
        %v626 = vmax.f32 %v558, 0.0
        %v627 = vmax.f32 %v471, 0.0
        %v628 = vmax.f32 %v560, 0.0
        %v629 = vmax.f32 %v474, 0.0
        %v630 = vmax.f32 %v563, 0.0
        %v631 = vmax.f32 %v476, 0.0
        %v632 = vmax.f32 %v565, 0.0
        %v633 = vmax.f32 %v479, 0.0
        %v634 = vmax.f32 %v568, 0.0
        %v635 = vmax.f32 %v481, 0.0
        %v636 = vmax.f32 %v570, 0.0
        %v637 = vmax.f32 %v484, 0.0
        %v638 = vmax.f32 %v573, 0.0
        %v639 = vmax.f32 %v486, 0.0
        %v640 = vmax.f32 %v575, 0.0
        %v641 = vpack.c.bf16 %v579, %v577
        %v642 = vpack.c.bf16 %v580, %v578
        %v643 = vpack.c.bf16 %v583, %v581
        %v644 = vpack.c.bf16 %v584, %v582
        %v645 = vpack.c.bf16 %v587, %v585
        %v646 = vpack.c.bf16 %v588, %v586
        %v647 = vpack.c.bf16 %v591, %v589
        %v648 = vpack.c.bf16 %v592, %v590
        %v649 = vpack.c.bf16 %v595, %v593
        %v650 = vpack.c.bf16 %v596, %v594
        %v651 = vpack.c.bf16 %v599, %v597
        %v652 = vpack.c.bf16 %v600, %v598
        %v653 = vpack.c.bf16 %v603, %v601
        %v654 = vpack.c.bf16 %v604, %v602
        %v655 = vpack.c.bf16 %v607, %v605
        %v656 = vpack.c.bf16 %v608, %v606
        %v657 = vpack.c.bf16 %v611, %v609
        %v658 = vpack.c.bf16 %v612, %v610
        %v659 = vpack.c.bf16 %v615, %v613
        %v660 = vpack.c.bf16 %v616, %v614
        %v661 = vpack.c.bf16 %v619, %v617
        %v662 = vpack.c.bf16 %v620, %v618
        %v663 = vpack.c.bf16 %v623, %v621
        %v664 = vpack.c.bf16 %v624, %v622
        %v665 = vpack.c.bf16 %v627, %v625
        %v666 = vpack.c.bf16 %v628, %v626
        %v667 = vpack.c.bf16 %v631, %v629
        %v668 = vpack.c.bf16 %v632, %v630
        %v669 = vpack.c.bf16 %v635, %v633
        %v670 = vpack.c.bf16 %v636, %v634
        %v671 = vpack.c.bf16 %v639, %v637
        %v672 = vpack.c.bf16 %v640, %v638
        %v673 = vld [vmem:[%s3] sm:$0xff]
        %v674 = vld [vmem:[%s3 + $0x8] sm:$0xff]
        %v675 = vld [vmem:[%s3 + $0x10] sm:$0xff]
        %v676 = vld [vmem:[%s3 + $0x18] sm:$0xff]
        %v677 = vld [vmem:[%s3 + $0x20] sm:$0xff]
        %v678 = vld [vmem:[%s3 + $0x28] sm:$0xff]
        %v679 = vld [vmem:[%s3 + $0x30] sm:$0xff]
        %v680 = vld [vmem:[%s3 + $0x38] sm:$0xff]
        %v681 = vld [vmem:[%s3 + $0x40] sm:$0xff]
        %v682 = vld [vmem:[%s3 + $0x48] sm:$0xff]
        %v683 = vld [vmem:[%s3 + $0x50] sm:$0xff]
        %v684 = vld [vmem:[%s3 + $0x58] sm:$0xff]
        %v685 = vld [vmem:[%s3 + $0x60] sm:$0xff]
        %v686 = vld [vmem:[%s3 + $0x68] sm:$0xff]
        %v687 = vld [vmem:[%s3 + $0x70] sm:$0xff]
        %v688 = vld [vmem:[%s3 + $0x78] sm:$0xff]
        %v689 = vld [vmem:[%s3 + $0x80] sm:$0xff]
        %v690 = vld [vmem:[%s3 + $0x88] sm:$0xff]
        %v691 = vld [vmem:[%s3 + $0x90] sm:$0xff]
        %v692 = vld [vmem:[%s3 + $0x98] sm:$0xff]
        %v693 = vld [vmem:[%s3 + $0xa0] sm:$0xff]
        %v694 = vld [vmem:[%s3 + $0xa8] sm:$0xff]
        %v695 = vld [vmem:[%s3 + $0xb0] sm:$0xff]
        %v696 = vld [vmem:[%s3 + $0xb8] sm:$0xff]
        %v697 = vld [vmem:[%s3 + $0xc0] sm:$0xff]
        %v698 = vld [vmem:[%s3 + $0xc8] sm:$0xff]
        %v699 = vld [vmem:[%s3 + $0xd0] sm:$0xff]
        %v700 = vld [vmem:[%s3 + $0xd8] sm:$0xff]
        %v701 = vld [vmem:[%s3 + $0xe0] sm:$0xff]
        %v702 = vld [vmem:[%s3 + $0xe8] sm:$0xff]
        %v703 = vld [vmem:[%s3 + $0xf0] sm:$0xff]
        %v704 = vld [vmem:[%s3 + $0xf8] sm:$0xff]
        %v705 = vld [vmem:[%s4] sm:$0x3]
        %v707 = vperm.slane %v705, 0
        %v708 = vperm.slane %v705, 1
        %v743 = vunpack.c.l.b16 %v673
        %v744 = vunpack.c.h.b16 %v673
        %v745 = vunpack.c.l.b16 %v674
        %v746 = vunpack.c.h.b16 %v674
        %v747 = vunpack.c.l.b16 %v675
        %v748 = vunpack.c.h.b16 %v675
        %v749 = vunpack.c.l.b16 %v676
        %v750 = vunpack.c.h.b16 %v676
        %v751 = vunpack.c.l.b16 %v677
        %v752 = vunpack.c.h.b16 %v677
        %v753 = vunpack.c.l.b16 %v678
        %v754 = vunpack.c.h.b16 %v678
        %v755 = vunpack.c.l.b16 %v679
        %v756 = vunpack.c.h.b16 %v679
        %v757 = vunpack.c.l.b16 %v680
        %v758 = vunpack.c.h.b16 %v680
        %v759 = vunpack.c.l.b16 %v681
        %v760 = vunpack.c.h.b16 %v681
        %v761 = vunpack.c.l.b16 %v682
        %v762 = vunpack.c.h.b16 %v682
        %v763 = vunpack.c.l.b16 %v683
        %v764 = vunpack.c.h.b16 %v683
        %v765 = vunpack.c.l.b16 %v684
        %v766 = vunpack.c.h.b16 %v684
        %v767 = vunpack.c.l.b16 %v685
        %v768 = vunpack.c.h.b16 %v685
        %v769 = vunpack.c.l.b16 %v686
        %v770 = vunpack.c.h.b16 %v686
        %v771 = vunpack.c.l.b16 %v687
        %v772 = vunpack.c.h.b16 %v687
        %v773 = vunpack.c.l.b16 %v688
        %v774 = vunpack.c.h.b16 %v688
        %v775 = vunpack.c.l.b16 %v689
        %v776 = vunpack.c.h.b16 %v689
        %v777 = vunpack.c.l.b16 %v690
        %v778 = vunpack.c.h.b16 %v690
        %v779 = vunpack.c.l.b16 %v691
        %v780 = vunpack.c.h.b16 %v691
        %v781 = vunpack.c.l.b16 %v692
        %v782 = vunpack.c.h.b16 %v692
        %v783 = vunpack.c.l.b16 %v693
        %v784 = vunpack.c.h.b16 %v693
        %v785 = vunpack.c.l.b16 %v694
        %v786 = vunpack.c.h.b16 %v694
        %v787 = vunpack.c.l.b16 %v695
        %v788 = vunpack.c.h.b16 %v695
        %v789 = vunpack.c.l.b16 %v696
        %v790 = vunpack.c.h.b16 %v696
        %v791 = vunpack.c.l.b16 %v697
        %v792 = vunpack.c.h.b16 %v697
        %v793 = vunpack.c.l.b16 %v698
        %v794 = vunpack.c.h.b16 %v698
        %v795 = vunpack.c.l.b16 %v699
        %v796 = vunpack.c.h.b16 %v699
        %v797 = vunpack.c.l.b16 %v700
        %v798 = vunpack.c.h.b16 %v700
        %v799 = vunpack.c.l.b16 %v701
        %v800 = vunpack.c.h.b16 %v701
        %v801 = vunpack.c.l.b16 %v702
        %v802 = vunpack.c.h.b16 %v702
        %v803 = vunpack.c.l.b16 %v703
        %v804 = vunpack.c.h.b16 %v703
        %v805 = vunpack.c.l.b16 %v704
        %v806 = vunpack.c.h.b16 %v704
        %v807 = vpack.c.b16 %v745, %v743
        %v808 = vpack.c.b16 %v746, %v744
        %v809 = vpack.c.b16 %v749, %v747
        %v810 = vpack.c.b16 %v750, %v748
        %v811 = vpack.c.b16 %v753, %v751
        %v812 = vpack.c.b16 %v754, %v752
        %v813 = vpack.c.b16 %v757, %v755
        %v814 = vpack.c.b16 %v758, %v756
        %v815 = vpack.c.b16 %v761, %v759
        %v816 = vpack.c.b16 %v762, %v760
        %v817 = vpack.c.b16 %v765, %v763
        %v818 = vpack.c.b16 %v766, %v764
        %v819 = vpack.c.b16 %v769, %v767
        %v820 = vpack.c.b16 %v770, %v768
        %v821 = vpack.c.b16 %v773, %v771
        %v822 = vpack.c.b16 %v774, %v772
        %v823 = vpack.c.b16 %v777, %v775
        %v824 = vpack.c.b16 %v778, %v776
        %v825 = vpack.c.b16 %v781, %v779
        %v826 = vpack.c.b16 %v782, %v780
        %v827 = vpack.c.b16 %v785, %v783
        %v828 = vpack.c.b16 %v786, %v784
        %v829 = vpack.c.b16 %v789, %v787
        %v830 = vpack.c.b16 %v790, %v788
        %v831 = vpack.c.b16 %v793, %v791
        %v832 = vpack.c.b16 %v794, %v792
        %v833 = vpack.c.b16 %v797, %v795
        %v834 = vpack.c.b16 %v798, %v796
        %v835 = vpack.c.b16 %v801, %v799
        %v836 = vpack.c.b16 %v802, %v800
        %v837 = vpack.c.b16 %v805, %v803
        %v838 = vpack.c.b16 %v806, %v804
        %871 = vmatpush.bf16.msra.mxu0 %v821
        %872 = vmatpush.bf16.msra.mxu0 %v819
        %873 = vmatpush.bf16.msra.mxu0 %v817
        %874 = vmatpush.bf16.msra.mxu0 %v815
        %875 = vmatpush.bf16.msra.mxu0 %v813
        %876 = vmatpush.bf16.msra.mxu0 %v811
        %877 = vmatpush.bf16.msra.mxu0 %v809
        %878 = vmatpush.bf16.msra.mxu0 %v807
        %879 = vmatmul.bf16.gmra.mxu0 %v641
        %v880 = vpop.f32.mrf.mxu0
        %v881 = vadd.f32 %v707, %v880
        %v882 = vpop.f32.mrf.mxu0
        %v883 = vadd.f32 %v707, %v882
        %884 = vmatmul.bf16.gmra.mxu0 %v643
        %v885 = vpop.f32.mrf.mxu0
        %v886 = vadd.f32 %v707, %v885
        %v887 = vpop.f32.mrf.mxu0
        %v888 = vadd.f32 %v707, %v887
        %889 = vmatmul.bf16.gmra.mxu0 %v645
        %v890 = vpop.f32.mrf.mxu0
        %v891 = vadd.f32 %v707, %v890
        %v892 = vpop.f32.mrf.mxu0
        %v893 = vadd.f32 %v707, %v892
        %894 = vmatmul.bf16.gmra.mxu0 %v647
        %v895 = vpop.f32.mrf.mxu0
        %v896 = vadd.f32 %v707, %v895
        %v897 = vpop.f32.mrf.mxu0
        %v898 = vadd.f32 %v707, %v897
        %899 = vmatmul.bf16.gmra.mxu0 %v649
        %v900 = vpop.f32.mrf.mxu0
        %v901 = vadd.f32 %v707, %v900
        %v902 = vpop.f32.mrf.mxu0
        %v903 = vadd.f32 %v707, %v902
        %904 = vmatmul.bf16.gmra.mxu0 %v651
        %v905 = vpop.f32.mrf.mxu0
        %v906 = vadd.f32 %v707, %v905
        %v907 = vpop.f32.mrf.mxu0
        %v908 = vadd.f32 %v707, %v907
        %909 = vmatmul.bf16.gmra.mxu0 %v653
        %v910 = vpop.f32.mrf.mxu0
        %v911 = vadd.f32 %v707, %v910
        %v912 = vpop.f32.mrf.mxu0
        %v913 = vadd.f32 %v707, %v912
        %914 = vmatmul.bf16.gmra.mxu0 %v655
        %v915 = vpop.f32.mrf.mxu0
        %v916 = vadd.f32 %v707, %v915
        %v917 = vpop.f32.mrf.mxu0
        %v918 = vadd.f32 %v707, %v917
        %919 = vmatmul.bf16.gmra.mxu0 %v657
        %v920 = vpop.f32.mrf.mxu0
        %v921 = vadd.f32 %v707, %v920
        %v922 = vpop.f32.mrf.mxu0
        %v923 = vadd.f32 %v707, %v922
        %924 = vmatmul.bf16.gmra.mxu0 %v659
        %v925 = vpop.f32.mrf.mxu0
        %v926 = vadd.f32 %v707, %v925
        %v927 = vpop.f32.mrf.mxu0
        %v928 = vadd.f32 %v707, %v927
        %929 = vmatmul.bf16.gmra.mxu0 %v661
        %v930 = vpop.f32.mrf.mxu0
        %v931 = vadd.f32 %v707, %v930
        %v932 = vpop.f32.mrf.mxu0
        %v933 = vadd.f32 %v707, %v932
        %934 = vmatmul.bf16.gmra.mxu0 %v663
        %v935 = vpop.f32.mrf.mxu0
        %v936 = vadd.f32 %v707, %v935
        %v937 = vpop.f32.mrf.mxu0
        %v938 = vadd.f32 %v707, %v937
        %939 = vmatmul.bf16.gmra.mxu0 %v665
        %v940 = vpop.f32.mrf.mxu0
        %v941 = vadd.f32 %v707, %v940
        %v942 = vpop.f32.mrf.mxu0
        %v943 = vadd.f32 %v707, %v942
        %944 = vmatmul.bf16.gmra.mxu0 %v667
        %v945 = vpop.f32.mrf.mxu0
        %v946 = vadd.f32 %v707, %v945
        %v947 = vpop.f32.mrf.mxu0
        %v948 = vadd.f32 %v707, %v947
        %949 = vmatmul.bf16.gmra.mxu0 %v669
        %v950 = vpop.f32.mrf.mxu0
        %v951 = vadd.f32 %v707, %v950
        %v952 = vpop.f32.mrf.mxu0
        %v953 = vadd.f32 %v707, %v952
        %954 = vmatmul.bf16.gmra.mxu0 %v671
        %v955 = vpop.f32.mrf.mxu0
        %v956 = vadd.f32 %v707, %v955
        %v957 = vpop.f32.mrf.mxu0
        %v958 = vadd.f32 %v707, %v957
        %959 = vdwg.mxu0
        %960 = vmatpush.bf16.msra.mxu0 %v837
        %961 = vmatpush.bf16.msra.mxu0 %v835
        %962 = vmatpush.bf16.msra.mxu0 %v833
        %963 = vmatpush.bf16.msra.mxu0 %v831
        %964 = vmatpush.bf16.msra.mxu0 %v829
        %965 = vmatpush.bf16.msra.mxu0 %v827
        %966 = vmatpush.bf16.msra.mxu0 %v825
        %967 = vmatpush.bf16.msra.mxu0 %v823
        %968 = vmatmul.bf16.gmra.mxu0 %v642
        %v969 = vpop.f32.mrf.mxu0
        %v970 = vadd.f32 %v881, %v969
        %v971 = vpop.f32.mrf.mxu0
        %v972 = vadd.f32 %v883, %v971
        %973 = vmatmul.bf16.gmra.mxu0 %v644
        %v974 = vpop.f32.mrf.mxu0
        %v975 = vadd.f32 %v886, %v974
        %v976 = vpop.f32.mrf.mxu0
        %v977 = vadd.f32 %v888, %v976
        %978 = vmatmul.bf16.gmra.mxu0 %v646
        %v979 = vpop.f32.mrf.mxu0
        %v980 = vadd.f32 %v891, %v979
        %v981 = vpop.f32.mrf.mxu0
        %v982 = vadd.f32 %v893, %v981
        %983 = vmatmul.bf16.gmra.mxu0 %v648
        %v984 = vpop.f32.mrf.mxu0
        %v985 = vadd.f32 %v896, %v984
        %v986 = vpop.f32.mrf.mxu0
        %v987 = vadd.f32 %v898, %v986
        %988 = vmatmul.bf16.gmra.mxu0 %v650
        %v989 = vpop.f32.mrf.mxu0
        %v990 = vadd.f32 %v901, %v989
        %v991 = vpop.f32.mrf.mxu0
        %v992 = vadd.f32 %v903, %v991
        %993 = vmatmul.bf16.gmra.mxu0 %v652
        %v994 = vpop.f32.mrf.mxu0
        %v995 = vadd.f32 %v906, %v994
        %v996 = vpop.f32.mrf.mxu0
        %v997 = vadd.f32 %v908, %v996
        %998 = vmatmul.bf16.gmra.mxu0 %v654
        %v999 = vpop.f32.mrf.mxu0
        %v1000 = vadd.f32 %v911, %v999
        %v1001 = vpop.f32.mrf.mxu0
        %v1002 = vadd.f32 %v913, %v1001
        %1003 = vmatmul.bf16.gmra.mxu0 %v656
        %v1004 = vpop.f32.mrf.mxu0
        %v1005 = vadd.f32 %v916, %v1004
        %v1006 = vpop.f32.mrf.mxu0
        %v1007 = vadd.f32 %v918, %v1006
        %1008 = vmatmul.bf16.gmra.mxu0 %v658
        %v1009 = vpop.f32.mrf.mxu0
        %v1010 = vadd.f32 %v921, %v1009
        %v1011 = vpop.f32.mrf.mxu0
        %v1012 = vadd.f32 %v923, %v1011
        %1013 = vmatmul.bf16.gmra.mxu0 %v660
        %v1014 = vpop.f32.mrf.mxu0
        %v1015 = vadd.f32 %v926, %v1014
        %v1016 = vpop.f32.mrf.mxu0
        %v1017 = vadd.f32 %v928, %v1016
        %1018 = vmatmul.bf16.gmra.mxu0 %v662
        %v1019 = vpop.f32.mrf.mxu0
        %v1020 = vadd.f32 %v931, %v1019
        %v1021 = vpop.f32.mrf.mxu0
        %v1022 = vadd.f32 %v933, %v1021
        %1023 = vmatmul.bf16.gmra.mxu0 %v664
        %v1024 = vpop.f32.mrf.mxu0
        %v1025 = vadd.f32 %v936, %v1024
        %v1026 = vpop.f32.mrf.mxu0
        %v1027 = vadd.f32 %v938, %v1026
        %1028 = vmatmul.bf16.gmra.mxu0 %v666
        %v1029 = vpop.f32.mrf.mxu0
        %v1030 = vadd.f32 %v941, %v1029
        %v1031 = vpop.f32.mrf.mxu0
        %v1032 = vadd.f32 %v943, %v1031
        %1033 = vmatmul.bf16.gmra.mxu0 %v668
        %v1034 = vpop.f32.mrf.mxu0
        %v1035 = vadd.f32 %v946, %v1034
        %v1036 = vpop.f32.mrf.mxu0
        %v1037 = vadd.f32 %v948, %v1036
        %1038 = vmatmul.bf16.gmra.mxu0 %v670
        %v1039 = vpop.f32.mrf.mxu0
        %v1040 = vadd.f32 %v951, %v1039
        %v1041 = vpop.f32.mrf.mxu0
        %v1042 = vadd.f32 %v953, %v1041
        %1043 = vmatmul.bf16.gmra.mxu0 %v672
        %v1044 = vpop.f32.mrf.mxu0
        %v1045 = vadd.f32 %v956, %v1044
        %v1046 = vpop.f32.mrf.mxu0
        %v1047 = vadd.f32 %v958, %v1046
        %1048 = vdwg.mxu0
        %1049 = vmatpush.bf16.msra.mxu0 %v822
        %1050 = vmatpush.bf16.msra.mxu0 %v820
        %1051 = vmatpush.bf16.msra.mxu0 %v818
        %1052 = vmatpush.bf16.msra.mxu0 %v816
        %1053 = vmatpush.bf16.msra.mxu0 %v814
        %1054 = vmatpush.bf16.msra.mxu0 %v812
        %1055 = vmatpush.bf16.msra.mxu0 %v810
        %1056 = vmatpush.bf16.msra.mxu0 %v808
        %1057 = vmatmul.bf16.gmra.mxu0 %v641
        %v1058 = vpop.f32.mrf.mxu0
        %v1059 = vadd.f32 %v708, %v1058
        %v1060 = vpop.f32.mrf.mxu0
        %v1061 = vadd.f32 %v708, %v1060
        %1062 = vmatmul.bf16.gmra.mxu0 %v643
        %v1063 = vpop.f32.mrf.mxu0
        %v1064 = vadd.f32 %v708, %v1063
        %v1065 = vpop.f32.mrf.mxu0
        %v1066 = vadd.f32 %v708, %v1065
        %1067 = vmatmul.bf16.gmra.mxu0 %v645
        %v1068 = vpop.f32.mrf.mxu0
        %v1069 = vadd.f32 %v708, %v1068
        %v1070 = vpop.f32.mrf.mxu0
        %v1071 = vadd.f32 %v708, %v1070
        %1072 = vmatmul.bf16.gmra.mxu0 %v647
        %v1073 = vpop.f32.mrf.mxu0
        %v1074 = vadd.f32 %v708, %v1073
        %v1075 = vpop.f32.mrf.mxu0
        %v1076 = vadd.f32 %v708, %v1075
        %1077 = vmatmul.bf16.gmra.mxu0 %v649
        %v1078 = vpop.f32.mrf.mxu0
        %v1079 = vadd.f32 %v708, %v1078
        %v1080 = vpop.f32.mrf.mxu0
        %v1081 = vadd.f32 %v708, %v1080
        %1082 = vmatmul.bf16.gmra.mxu0 %v651
        %v1083 = vpop.f32.mrf.mxu0
        %v1084 = vadd.f32 %v708, %v1083
        %v1085 = vpop.f32.mrf.mxu0
        %v1086 = vadd.f32 %v708, %v1085
        %1087 = vmatmul.bf16.gmra.mxu0 %v653
        %v1088 = vpop.f32.mrf.mxu0
        %v1089 = vadd.f32 %v708, %v1088
        %v1090 = vpop.f32.mrf.mxu0
        %v1091 = vadd.f32 %v708, %v1090
        %1092 = vmatmul.bf16.gmra.mxu0 %v655
        %v1093 = vpop.f32.mrf.mxu0
        %v1094 = vadd.f32 %v708, %v1093
        %v1095 = vpop.f32.mrf.mxu0
        %v1096 = vadd.f32 %v708, %v1095
        %1097 = vmatmul.bf16.gmra.mxu0 %v657
        %v1098 = vpop.f32.mrf.mxu0
        %v1099 = vadd.f32 %v708, %v1098
        %v1100 = vpop.f32.mrf.mxu0
        %v1101 = vadd.f32 %v708, %v1100
        %1102 = vmatmul.bf16.gmra.mxu0 %v659
        %v1103 = vpop.f32.mrf.mxu0
        %v1104 = vadd.f32 %v708, %v1103
        %v1105 = vpop.f32.mrf.mxu0
        %v1106 = vadd.f32 %v708, %v1105
        %1107 = vmatmul.bf16.gmra.mxu0 %v661
        %v1108 = vpop.f32.mrf.mxu0
        %v1109 = vadd.f32 %v708, %v1108
        %v1110 = vpop.f32.mrf.mxu0
        %v1111 = vadd.f32 %v708, %v1110
        %1112 = vmatmul.bf16.gmra.mxu0 %v663
        %v1113 = vpop.f32.mrf.mxu0
        %v1114 = vadd.f32 %v708, %v1113
        %v1115 = vpop.f32.mrf.mxu0
        %v1116 = vadd.f32 %v708, %v1115
        %1117 = vmatmul.bf16.gmra.mxu0 %v665
        %v1118 = vpop.f32.mrf.mxu0
        %v1119 = vadd.f32 %v708, %v1118
        %v1120 = vpop.f32.mrf.mxu0
        %v1121 = vadd.f32 %v708, %v1120
        %1122 = vmatmul.bf16.gmra.mxu0 %v667
        %v1123 = vpop.f32.mrf.mxu0
        %v1124 = vadd.f32 %v708, %v1123
        %v1125 = vpop.f32.mrf.mxu0
        %v1126 = vadd.f32 %v708, %v1125
        %1127 = vmatmul.bf16.gmra.mxu0 %v669
        %v1128 = vpop.f32.mrf.mxu0
        %v1129 = vadd.f32 %v708, %v1128
        %v1130 = vpop.f32.mrf.mxu0
        %v1131 = vadd.f32 %v708, %v1130
        %1132 = vmatmul.bf16.gmra.mxu0 %v671
        %v1133 = vpop.f32.mrf.mxu0
        %v1134 = vadd.f32 %v708, %v1133
        %v1135 = vpop.f32.mrf.mxu0
        %v1136 = vadd.f32 %v708, %v1135
        %1137 = vdwg.mxu0
        %1138 = vmatpush.bf16.msra.mxu0 %v838
        %1139 = vmatpush.bf16.msra.mxu0 %v836
        %1140 = vmatpush.bf16.msra.mxu0 %v834
        %1141 = vmatpush.bf16.msra.mxu0 %v832
        %1142 = vmatpush.bf16.msra.mxu0 %v830
        %1143 = vmatpush.bf16.msra.mxu0 %v828
        %1144 = vmatpush.bf16.msra.mxu0 %v826
        %1145 = vmatpush.bf16.msra.mxu0 %v824
        %1146 = vmatmul.bf16.gmra.mxu0 %v642
        %v1147 = vpop.f32.mrf.mxu0
        %v1148 = vadd.f32 %v1059, %v1147
        %v1149 = vpop.f32.mrf.mxu0
        %v1150 = vadd.f32 %v1061, %v1149
        %1151 = vmatmul.bf16.gmra.mxu0 %v644
        %v1152 = vpop.f32.mrf.mxu0
        %v1153 = vadd.f32 %v1064, %v1152
        %v1154 = vpop.f32.mrf.mxu0
        %v1155 = vadd.f32 %v1066, %v1154
        %1156 = vmatmul.bf16.gmra.mxu0 %v646
        %v1157 = vpop.f32.mrf.mxu0
        %v1158 = vadd.f32 %v1069, %v1157
        %v1159 = vpop.f32.mrf.mxu0
        %v1160 = vadd.f32 %v1071, %v1159
        %1161 = vmatmul.bf16.gmra.mxu0 %v648
        %v1162 = vpop.f32.mrf.mxu0
        %v1163 = vadd.f32 %v1074, %v1162
        %v1164 = vpop.f32.mrf.mxu0
        %v1165 = vadd.f32 %v1076, %v1164
        %1166 = vmatmul.bf16.gmra.mxu0 %v650
        %v1167 = vpop.f32.mrf.mxu0
        %v1168 = vadd.f32 %v1079, %v1167
        %v1169 = vpop.f32.mrf.mxu0
        %v1170 = vadd.f32 %v1081, %v1169
        %1171 = vmatmul.bf16.gmra.mxu0 %v652
        %v1172 = vpop.f32.mrf.mxu0
        %v1173 = vadd.f32 %v1084, %v1172
        %v1174 = vpop.f32.mrf.mxu0
        %v1175 = vadd.f32 %v1086, %v1174
        %1176 = vmatmul.bf16.gmra.mxu0 %v654
        %v1177 = vpop.f32.mrf.mxu0
        %v1178 = vadd.f32 %v1089, %v1177
        %v1179 = vpop.f32.mrf.mxu0
        %v1180 = vadd.f32 %v1091, %v1179
        %1181 = vmatmul.bf16.gmra.mxu0 %v656
        %v1182 = vpop.f32.mrf.mxu0
        %v1183 = vadd.f32 %v1094, %v1182
        %v1184 = vpop.f32.mrf.mxu0
        %v1185 = vadd.f32 %v1096, %v1184
        %1186 = vmatmul.bf16.gmra.mxu0 %v658
        %v1187 = vpop.f32.mrf.mxu0
        %v1188 = vadd.f32 %v1099, %v1187
        %v1189 = vpop.f32.mrf.mxu0
        %v1190 = vadd.f32 %v1101, %v1189
        %1191 = vmatmul.bf16.gmra.mxu0 %v660
        %v1192 = vpop.f32.mrf.mxu0
        %v1193 = vadd.f32 %v1104, %v1192
        %v1194 = vpop.f32.mrf.mxu0
        %v1195 = vadd.f32 %v1106, %v1194
        %1196 = vmatmul.bf16.gmra.mxu0 %v662
        %v1197 = vpop.f32.mrf.mxu0
        %v1198 = vadd.f32 %v1109, %v1197
        %v1199 = vpop.f32.mrf.mxu0
        %v1200 = vadd.f32 %v1111, %v1199
        %1201 = vmatmul.bf16.gmra.mxu0 %v664
        %v1202 = vpop.f32.mrf.mxu0
        %v1203 = vadd.f32 %v1114, %v1202
        %v1204 = vpop.f32.mrf.mxu0
        %v1205 = vadd.f32 %v1116, %v1204
        %1206 = vmatmul.bf16.gmra.mxu0 %v666
        %v1207 = vpop.f32.mrf.mxu0
        %v1208 = vadd.f32 %v1119, %v1207
        %v1209 = vpop.f32.mrf.mxu0
        %v1210 = vadd.f32 %v1121, %v1209
        %1211 = vmatmul.bf16.gmra.mxu0 %v668
        %v1212 = vpop.f32.mrf.mxu0
        %v1213 = vadd.f32 %v1124, %v1212
        %v1214 = vpop.f32.mrf.mxu0
        %v1215 = vadd.f32 %v1126, %v1214
        %1216 = vmatmul.bf16.gmra.mxu0 %v670
        %v1217 = vpop.f32.mrf.mxu0
        %v1218 = vadd.f32 %v1129, %v1217
        %v1219 = vpop.f32.mrf.mxu0
        %v1220 = vadd.f32 %v1131, %v1219
        %1221 = vmatmul.bf16.gmra.mxu0 %v672
        %v1222 = vpop.f32.mrf.mxu0
        %v1223 = vadd.f32 %v1134, %v1222
        %v1224 = vpop.f32.mrf.mxu0
        %v1225 = vadd.f32 %v1136, %v1224
        %1226 = vdwg.mxu0
        %v1227 = vmax.f32 %v970, 0.0
        %v1228 = vmax.f32 %v1148, 0.0
        %v1229 = vmax.f32 %v972, 0.0
        %v1230 = vmax.f32 %v1150, 0.0
        %v1231 = vmax.f32 %v975, 0.0
        %v1232 = vmax.f32 %v1153, 0.0
        %v1233 = vmax.f32 %v977, 0.0
        %v1234 = vmax.f32 %v1155, 0.0
        %v1235 = vmax.f32 %v980, 0.0
        %v1236 = vmax.f32 %v1158, 0.0
        %v1237 = vmax.f32 %v982, 0.0
        %v1238 = vmax.f32 %v1160, 0.0
        %v1239 = vmax.f32 %v985, 0.0
        %v1240 = vmax.f32 %v1163, 0.0
        %v1241 = vmax.f32 %v987, 0.0
        %v1242 = vmax.f32 %v1165, 0.0
        %v1243 = vmax.f32 %v990, 0.0
        %v1244 = vmax.f32 %v1168, 0.0
        %v1245 = vmax.f32 %v992, 0.0
        %v1246 = vmax.f32 %v1170, 0.0
        %v1247 = vmax.f32 %v995, 0.0
        %v1248 = vmax.f32 %v1173, 0.0
        %v1249 = vmax.f32 %v997, 0.0
        %v1250 = vmax.f32 %v1175, 0.0
        %v1251 = vmax.f32 %v1000, 0.0
        %v1252 = vmax.f32 %v1178, 0.0
        %v1253 = vmax.f32 %v1002, 0.0
        %v1254 = vmax.f32 %v1180, 0.0
        %v1255 = vmax.f32 %v1005, 0.0
        %v1256 = vmax.f32 %v1183, 0.0
        %v1257 = vmax.f32 %v1007, 0.0
        %v1258 = vmax.f32 %v1185, 0.0
        %v1259 = vmax.f32 %v1010, 0.0
        %v1260 = vmax.f32 %v1188, 0.0
        %v1261 = vmax.f32 %v1012, 0.0
        %v1262 = vmax.f32 %v1190, 0.0
        %v1263 = vmax.f32 %v1015, 0.0
        %v1264 = vmax.f32 %v1193, 0.0
        %v1265 = vmax.f32 %v1017, 0.0
        %v1266 = vmax.f32 %v1195, 0.0
        %v1267 = vmax.f32 %v1020, 0.0
        %v1268 = vmax.f32 %v1198, 0.0
        %v1269 = vmax.f32 %v1022, 0.0
        %v1270 = vmax.f32 %v1200, 0.0
        %v1271 = vmax.f32 %v1025, 0.0
        %v1272 = vmax.f32 %v1203, 0.0
        %v1273 = vmax.f32 %v1027, 0.0
        %v1274 = vmax.f32 %v1205, 0.0
        %v1275 = vmax.f32 %v1030, 0.0
        %v1276 = vmax.f32 %v1208, 0.0
        %v1277 = vmax.f32 %v1032, 0.0
        %v1278 = vmax.f32 %v1210, 0.0
        %v1279 = vmax.f32 %v1035, 0.0
        %v1280 = vmax.f32 %v1213, 0.0
        %v1281 = vmax.f32 %v1037, 0.0
        %v1282 = vmax.f32 %v1215, 0.0
        %v1283 = vmax.f32 %v1040, 0.0
        %v1284 = vmax.f32 %v1218, 0.0
        %v1285 = vmax.f32 %v1042, 0.0
        %v1286 = vmax.f32 %v1220, 0.0
        %v1287 = vmax.f32 %v1045, 0.0
        %v1288 = vmax.f32 %v1223, 0.0
        %v1289 = vmax.f32 %v1047, 0.0
        %v1290 = vmax.f32 %v1225, 0.0
        %v1291 = vld [vmem:[%s5] sm:$0x3]
        %v1292 = vpack.c.bf16 %v1229, %v1227
        %v1293 = vpack.c.bf16 %v1230, %v1228
        %v1294 = vpack.c.bf16 %v1233, %v1231
        %v1295 = vpack.c.bf16 %v1234, %v1232
        %v1296 = vpack.c.bf16 %v1237, %v1235
        %v1297 = vpack.c.bf16 %v1238, %v1236
        %v1298 = vpack.c.bf16 %v1241, %v1239
        %v1299 = vpack.c.bf16 %v1242, %v1240
        %v1300 = vpack.c.bf16 %v1245, %v1243
        %v1301 = vpack.c.bf16 %v1246, %v1244
        %v1302 = vpack.c.bf16 %v1249, %v1247
        %v1303 = vpack.c.bf16 %v1250, %v1248
        %v1304 = vpack.c.bf16 %v1253, %v1251
        %v1305 = vpack.c.bf16 %v1254, %v1252
        %v1306 = vpack.c.bf16 %v1257, %v1255
        %v1307 = vpack.c.bf16 %v1258, %v1256
        %v1308 = vpack.c.bf16 %v1261, %v1259
        %v1309 = vpack.c.bf16 %v1262, %v1260
        %v1310 = vpack.c.bf16 %v1265, %v1263
        %v1311 = vpack.c.bf16 %v1266, %v1264
        %v1312 = vpack.c.bf16 %v1269, %v1267
        %v1313 = vpack.c.bf16 %v1270, %v1268
        %v1314 = vpack.c.bf16 %v1273, %v1271
        %v1315 = vpack.c.bf16 %v1274, %v1272
        %v1316 = vpack.c.bf16 %v1277, %v1275
        %v1317 = vpack.c.bf16 %v1278, %v1276
        %v1318 = vpack.c.bf16 %v1281, %v1279
        %v1319 = vpack.c.bf16 %v1282, %v1280
        %v1320 = vpack.c.bf16 %v1285, %v1283
        %v1321 = vpack.c.bf16 %v1286, %v1284
        %v1322 = vpack.c.bf16 %v1289, %v1287
        %v1323 = vpack.c.bf16 %v1290, %v1288
        %v1324 = vld [vmem:[#allocation2] sm:$0x1]
        %1326 = vset.pattern.permute.xlu0 0
        %1327 = vperm.xlu0 %1326, %v1324
        %v1328 = vpop.permute.xlu0 %1327
        %v1330 = vperm.slane %v1328, 0
        %1332 = vst [vmem:[#allocation1] ss:$9 sm:$0xff] %v1291
        %v1333 = vld [vmem:[#allocation1] sm:$0xff]
        %v1334 = vld [vmem:[#allocation1 + $0x9] sm:$0xff]
        %1337 = vmatpush.bf16.xpose.msra.mxu0 %v1306
        %1338 = vmatpush.bf16.xpose.msra.mxu0 %v1304
        %1339 = vmatpush.bf16.xpose.msra.mxu0 %v1302
        %1340 = vmatpush.bf16.xpose.msra.mxu0 %v1300
        %1341 = vmatpush.bf16.xpose.msra.mxu0 %v1298
        %1342 = vmatpush.bf16.xpose.msra.mxu0 %v1296
        %1343 = vmatpush.bf16.xpose.msra.mxu0 %v1294
        %1344 = vmatpush.bf16.xpose.msra.mxu0 %v1292
        %1345 = vmatmul.bf16.gmra.mxu0 %v1333
        %v1346 = vpop.f32.mrf.mxu0
        %v1347 = vadd.f32 %v1330, %v1346
        %v1348 = vpop.f32.mrf.mxu0
        %1349 = vdwg.mxu0
        %1350 = vmatpush.bf16.xpose.msra.mxu0 %v1307
        %1351 = vmatpush.bf16.xpose.msra.mxu0 %v1305
        %1352 = vmatpush.bf16.xpose.msra.mxu0 %v1303
        %1353 = vmatpush.bf16.xpose.msra.mxu0 %v1301
        %1354 = vmatpush.bf16.xpose.msra.mxu0 %v1299
        %1355 = vmatpush.bf16.xpose.msra.mxu0 %v1297
        %1356 = vmatpush.bf16.xpose.msra.mxu0 %v1295
        %1357 = vmatpush.bf16.xpose.msra.mxu0 %v1293
        %1358 = vmatmul.bf16.gmra.mxu0 %v1334
        %v1359 = vpop.f32.mrf.mxu0
        %v1360 = vadd.f32 %v1347, %v1359
        %v1361 = vpop.f32.mrf.mxu0
        %1362 = vdwg.mxu0
        %1363 = vmatpush.bf16.xpose.msra.mxu0 %v1322
        %1364 = vmatpush.bf16.xpose.msra.mxu0 %v1320
        %1365 = vmatpush.bf16.xpose.msra.mxu0 %v1318
        %1366 = vmatpush.bf16.xpose.msra.mxu0 %v1316
        %1367 = vmatpush.bf16.xpose.msra.mxu0 %v1314
        %1368 = vmatpush.bf16.xpose.msra.mxu0 %v1312
        %1369 = vmatpush.bf16.xpose.msra.mxu0 %v1310
        %1370 = vmatpush.bf16.xpose.msra.mxu0 %v1308
        %1371 = vmatmul.bf16.gmra.mxu0 %v1333
        %v1372 = vpop.f32.mrf.mxu0
        %v1373 = vadd.f32 %v1330, %v1372
        %v1374 = vpop.f32.mrf.mxu0
        %1375 = vdwg.mxu0
        %1376 = vmatpush.bf16.xpose.msra.mxu0 %v1323
        %1377 = vmatpush.bf16.xpose.msra.mxu0 %v1321
        %1378 = vmatpush.bf16.xpose.msra.mxu0 %v1319
        %1379 = vmatpush.bf16.xpose.msra.mxu0 %v1317
        %1380 = vmatpush.bf16.xpose.msra.mxu0 %v1315
        %1381 = vmatpush.bf16.xpose.msra.mxu0 %v1313
        %1382 = vmatpush.bf16.xpose.msra.mxu0 %v1311
        %1383 = vmatpush.bf16.xpose.msra.mxu0 %v1309
        %1384 = vmatmul.bf16.gmra.mxu0 %v1334
        %v1385 = vpop.f32.mrf.mxu0
        %v1386 = vadd.f32 %v1373, %v1385
        %v1387 = vpop.f32.mrf.mxu0
        %1388 = vdwg.mxu0
        %v1391 = vrot.slane %v1386, 7
        %vm1392 = vcmask 1040384
        %v1393 = vsel %vm1392, %v1360, %v1391
        %v1395 = vlaneseq
        %vm1396 = vcmp.ge.s32.totalorder %v1395, 0
        %vm1397 = vcmp.lt.s32.totalorder %v1395, 256
        %vm1398 = vmand %vm1396, %vm1397
        %1399 = vst.msk [vmem:[%s274] sm:$0x3] %vm1398, %v1393
        %s1400 = sand.u32 %s183, 1
        %s1401 = scalar_lea.sflag [#allocation4], %s1400
        %s1402 = sand.u32 %s183, 1
        %s1403 = smul.addr %s1402, 2
        %s1404 = scalar_lea.vmem [#allocation3], %s1403
        // Predicated region
        $region49: #{tpu_custom_call.1} parent=47 // pred_check
          %p1405 = pneg %p193
        $region50: #{tpu_custom_call.1} parent=47 // pred_check_branch
          %1407 = sbr.rel (%p1405) target = $region52
        $region51: #{tpu_custom_call.1} parent=47 // pred_region
          %s1408 = smul.u32 2, %s23
          %1410 = vsyncadd %s1401, 0
          %s1411 = scalar_lea.hbm %s7, %s1408
          %s1413 = sshll.u32 %s1404, 4
          %s1414 = int_to_ptr.vmem [resolvable:$true] %s1413
          %s1415 = sshll.u32 %s1411, 4
          %s1416 = int_to_ptr.hbm [resolvable:$true] %s1415
          %1418 = dma.vmem_to_hbm [thread:$0]  %s1414, 32, %s1416, %s1401
        $region52: #{tpu_custom_call.1} parent=47 // pred_fallthru
          _
      $region48: #{tpu_custom_call.1} parent=5 // pred_fallthru
        _
      %p1419 = scmp.le.s32.totalorder 2, %s18
      // Predicated region
      $region53: #{tpu_custom_call.1} parent=5 // pred_check
        %p1420 = pneg %p1419
      $region54: #{tpu_custom_call.1} parent=5 // pred_check_branch
        %1422 = sbr.rel (%p1420) target = $region56
      $region55: #{tpu_custom_call.1} parent=5 // pred_region
        %s1423 = ssub.s32 %s18, 2
        // Predicated region
        $region57: #{tpu_custom_call.1} parent=55 // pred_check
          %p1424 = pneg %p199
        $region58: #{tpu_custom_call.1} parent=55 // pred_check_branch
          %1426 = sbr.rel (%p1424) target = $region60
        $region59: #{tpu_custom_call.1} parent=55 // pred_region
          %s1427 = sand.u32 %s184, 1
          %s1428 = scalar_lea.sflag [#allocation4], %s1427
          %s1429 = sand.u32 %s184, 1
          %s1430 = smul.addr %s1429, 2
          %s1431 = scalar_lea.vmem [#allocation3], %s1430
          %1433 = dma.done %s1428, 32
        $region60: #{tpu_custom_call.1} parent=55 // pred_fallthru
          _
      $region56: #{tpu_custom_call.1} parent=5 // pred_fallthru
        _
    $region6: #{tpu_custom_call.1} parent=1 // loop_footer
      %s22 = sadd.s32 1, %s18
    $region7: #{tpu_custom_call.1} parent=1 // loop_footer_branch
      %17 = sbr.rel target = $region3
    $region8: #{tpu_custom_call.1} parent=1 // loop_exit
      _
    %1434 = vsyncpa [#allocation4], 1
    %s1435 = scalar_lea.sflag [#allocation4], 1
    %1436 = vsyncpa %s1435, 1

</llo_original>
